<compile_context>
chip_gen: v5e
topology: v5e:2x2
jax: 0.10.0
libtpu: 0.0.40
codegen_flags: <defaults>
</compile_context>

<pallas_src>
import jax
import jax.numpy as jnp
from jax import lax
from jax.experimental import pallas as pl
from jax.experimental.pallas import tpu as pltpu

_LANES = 128
_ROW_ALIGN = 32        # sublane alignment valid for f32 (8), bf16 (16), int8/fp8 (32)
_CHUNK_ROWS = 512      # in-kernel sub-chunk: 512x128 f32 temporaries = 256 KiB
_SPLIT_MIN_ROWS = 1024 # above this, force >= 2 grid blocks (v7x: one per TensorCore)


def _ceil_to(x, m):
    return -(-x // m) * m


def _build_mse_kernel(block_rows, chunk_rows, num_blocks, last_valid_rows):
    """Per-block partial-sum kernel, fully specialized on the static geometry."""
    n_chunks = block_rows // chunk_rows

    def chunk_sq_sum(p_ref, t_ref, start_row, valid_rows):
        # Upcast in-kernel so bf16 inputs stay bf16 in HBM (mem-bound kernel).
        p = p_ref[pl.ds(start_row, chunk_rows), :].astype(jnp.float32)
        t = t_ref[pl.ds(start_row, chunk_rows), :].astype(jnp.float32)
        d = p - t
        sq = d * d
        if valid_rows is not None and valid_rows < chunk_rows:
            # Mask stale rows of the ragged final block (they may hold garbage).
            rid = lax.broadcasted_iota(jnp.int32, (chunk_rows, _LANES), 0)
            sq = jnp.where(rid < valid_rows, sq, 0.0)
        # Fold into one vreg-shaped (8, 128) partial: leading-axis sum = pure VPU.
        return sq.reshape(chunk_rows // 8, 8, _LANES).sum(axis=0)

    def full_block_sum(p_ref, t_ref):
        if n_chunks == 1:
            return chunk_sq_sum(p_ref, t_ref, 0, None)

        def body(c, acc):
            start = pl.multiple_of(c * chunk_rows, chunk_rows)
            return acc + chunk_sq_sum(p_ref, t_ref, start, None)

        return lax.fori_loop(0, n_chunks, body, jnp.zeros((8, _LANES), jnp.float32))

    def last_block_sum(p_ref, t_ref):
        n_full = last_valid_rows // chunk_rows
        rem = last_valid_rows - n_full * chunk_rows
        acc = jnp.zeros((8, _LANES), jnp.float32)
        if n_full == 1:
            acc = chunk_sq_sum(p_ref, t_ref, 0, None)
        elif n_full > 1:
            def body(c, a):
                start = pl.multiple_of(c * chunk_rows, chunk_rows)
                return a + chunk_sq_sum(p_ref, t_ref, start, None)
            acc = lax.fori_loop(0, n_full, body, acc)
        if rem:
            acc = acc + chunk_sq_sum(p_ref, t_ref, n_full * chunk_rows, rem)
        return acc

    def kernel(p_ref, t_ref, o_ref):
        if num_blocks == 1:
            o_ref[...] = last_block_sum(p_ref, t_ref)
        elif last_valid_rows == block_rows:
            o_ref[...] = full_block_sum(p_ref, t_ref)
        else:
            b = pl.program_id(0)

            @pl.when(b < num_blocks - 1)
            def _():
                o_ref[...] = full_block_sum(p_ref, t_ref)

            @pl.when(b == num_blocks - 1)
            def _():
                o_ref[...] = last_block_sum(p_ref, t_ref)

    return kernel


def vae_regression_loss(targets, preds, kl_loss, recon_loss, *, block_rows=8192):
    """VAERegressionLoss forward: mean MSE(preds, targets) + kl_loss + recon_loss."""
    # PyTorch: targets.squeeze(1) when it has a singleton dim 1.
    if targets.ndim > 1 and targets.shape[1] == 1:
        targets = jnp.squeeze(targets, axis=1)
    if preds.shape != targets.shape:
        # nn.MSELoss broadcasts (with a warning); mirror that.
        preds, targets = jnp.broadcast_arrays(preds, targets)

    n_valid = int(preds.size)  # true element count for the mean (static)

    p_flat = preds.reshape(-1)
    t_flat = targets.reshape(-1)

    lane_pad = (-n_valid) % _LANES
    if lane_pad:
        # TODO(synk): a lane-dense 2-D view needs n % 128 == 0; this minimal zero-pad
        # of BOTH operands (padded lanes contribute exactly 0) is the only copy left —
        # rank-1 kernel operands would avoid it but have a degenerate (1,N) TPU layout.
        p_flat = jnp.pad(p_flat, (0, lane_pad))
        t_flat = jnp.pad(t_flat, (0, lane_pad))
    rows = (n_valid + lane_pad) // _LANES

    p2 = p_flat.reshape(rows, _LANES)
    t2 = t_flat.reshape(rows, _LANES)

    # --- static block geometry (no padding to block size; tail masked in-kernel) ---
    req = max(int(block_rows), _ROW_ALIGN)
    if rows >= 2 * req:
        desired = req                       # many large blocks
    elif rows > _SPLIT_MIN_ROWS:
        desired = -(-rows // 2)             # exactly 2 blocks (v7x: one per TensorCore)
    else:
        desired = rows                      # single block (small input)
    if desired > _CHUNK_ROWS:
        blk = _ceil_to(desired, _CHUNK_ROWS)
        chunk = _CHUNK_ROWS
    else:
        blk = _ceil_to(desired, _ROW_ALIGN)
        chunk = blk
    num_blocks = -(-rows // blk)
    last_valid_rows = rows - (num_blocks - 1) * blk

    kernel = _build_mse_kernel(blk, chunk, num_blocks, last_valid_rows)

    bytes_accessed = (p2.size * p2.dtype.itemsize + t2.size * t2.dtype.itemsize
                      + num_blocks * 8 * _LANES * 4)
    cost = pl.CostEstimate(flops=3 * rows * _LANES, transcendentals=0,
                           bytes_accessed=bytes_accessed)

    partials = pl.pallas_call(
        kernel,
        out_shape=jax.ShapeDtypeStruct((num_blocks * 8, _LANES), jnp.float32),
        grid_spec=pltpu.PrefetchScalarGridSpec(
            num_scalar_prefetch=0,
            grid=(num_blocks,),
            in_specs=[
                pl.BlockSpec((blk, _LANES), lambda i: (i, 0)),
                pl.BlockSpec((blk, _LANES), lambda i: (i, 0)),
            ],
            out_specs=pl.BlockSpec((8, _LANES), lambda i: (i, 0)),
        ),
        compiler_params=pltpu.CompilerParams(
            # Each block writes its own lane-dense partial -> no cross-step dependency.
            dimension_semantics=("parallel",),
            # 2 inputs x 2 buffers x 4 MiB (f32, 8192 rows) = 16 MiB; covers v5e's
            # 16 MiB default scoped VMEM while staying under every chip's physical VMEM.
            vmem_limit_bytes=32 * 1024 * 1024,
        ),
        cost_estimate=cost,
    )(p2, t2)

    mse = jnp.sum(partials) / jnp.float32(n_valid)
    # TODO(synk): the PyTorch .to('cpu') transfers are no-ops here (single-device JAX).
    return (mse
            + jnp.asarray(kl_loss, dtype=jnp.float32).reshape(())
            + jnp.asarray(recon_loss, dtype=jnp.float32).reshape(()))


if __name__ == "__main__":
    key = jax.random.PRNGKey(0)
    k1, k2, k3, k4 = jax.random.split(key, 4)

    kl_loss = jax.random.uniform(k3, (), dtype=jnp.float32)
    recon_loss = jax.random.uniform(k4, (), dtype=jnp.float32)

    # 1) Small batch, (B,1) targets (squeezed inside), n not a multiple of 128.
    batch = 200
    preds = jax.random.normal(k1, (batch,), dtype=jnp.float32)
    targets = jax.random.normal(k2, (batch, 1), dtype=jnp.float32)
    ref = jnp.mean((preds - jnp.squeeze(targets, 1)) ** 2) + kl_loss + recon_loss
    loss = jax.block_until_ready(vae_regression_loss(targets, preds, kl_loss, recon_loss))
    assert jnp.allclose(loss, ref, rtol=1e-5, atol=1e-6), (loss, ref)

    # 2) bf16 inputs, multi-block grid (pl.when branches + masked final block),
    #    block_rows=32 is a multiple of the bf16 (16,128) min tile.
    batch2 = 80 * 128
    p_bf = jax.random.normal(k1, (batch2,), dtype=jnp.float32).astype(jnp.bfloat16)
    t_bf = jax.random.normal(k2, (batch2, 1), dtype=jnp.float32).astype(jnp.bfloat16)
    ref2 = (jnp.mean((p_bf.astype(jnp.float32)
                      - jnp.squeeze(t_bf, 1).astype(jnp.float32)) ** 2)
            + kl_loss + recon_loss)
    loss2 = jax.block_until_ready(
        vae_regression_loss(t_bf, p_bf, kl_loss, recon_loss, block_rows=32))
    assert jnp.allclose(loss2, ref2, rtol=1e-5, atol=1e-5), (loss2, ref2)

    # 3) Mid-size f32 input: 2-block split + in-block chunk loop + masked ragged tail.
    batch3 = 1100 * 128
    p3 = jax.random.normal(k1, (batch3,), dtype=jnp.float32)
    t3 = jax.random.normal(k2, (batch3,), dtype=jnp.float32)
    ref3 = jnp.mean((p3 - t3) ** 2) + kl_loss + recon_loss
    loss3 = jax.block_until_ready(vae_regression_loss(t3, p3, kl_loss, recon_loss))
    assert jnp.allclose(loss3, ref3, rtol=1e-5, atol=1e-6), (loss3, ref3)

    print("KERNEL_OK")
</pallas_src>

<mosaic_0001>
module attributes {stable_mosaic.version = 11 : i64} {
  func.func @kernel(%arg0: i32, %arg1: memref<32x128xf32, #tpu.memory_space<vmem>>, %arg2: memref<32x128xf32, #tpu.memory_space<vmem>>, %arg3: memref<8x128xf32, #tpu.memory_space<vmem>>) attributes {dimension_semantics = [#tpu.dimension_semantics<parallel>], iteration_bounds = array<i64: 1>, scalar_prefetch = 0 : i64, scratch_operands = 0 : i64, tpu.core_type = #tpu.core_type<tc>, window_params = [{transform_indices = @transform_0, window_bounds = array<i64: 32, 128>}, {transform_indices = @transform_1, window_bounds = array<i64: 32, 128>}, {transform_indices = @transform_2, window_bounds = array<i64: 8, 128>}]} {
    %cst = arith.constant 0.000000e+00 : f32
    %0 = vector.broadcast %cst : f32 to vector<8x128xf32>
    %c0 = arith.constant 0 : index
    %c0_0 = arith.constant 0 : index
    %1 = vector.load %arg1[%c0, %c0_0] : memref<32x128xf32, #tpu.memory_space<vmem>>, vector<32x128xf32>
    %c0_1 = arith.constant 0 : index
    %c0_2 = arith.constant 0 : index
    %2 = vector.load %arg2[%c0_1, %c0_2] : memref<32x128xf32, #tpu.memory_space<vmem>>, vector<32x128xf32>
    %3 = arith.subf %1, %2 : vector<32x128xf32>
    %4 = arith.mulf %3, %3 : vector<32x128xf32>
    %5 = tpu.iota {dimensions = array<i32: 0>} : vector<32x128xi32>
    %c2_i32 = arith.constant 2 : i32
    %6 = vector.broadcast %c2_i32 : i32 to vector<32x128xi32>
    %7 = arith.cmpi slt, %5, %6 : vector<32x128xi32>
    %cst_3 = arith.constant 0.000000e+00 : f32
    %8 = vector.broadcast %cst_3 : f32 to vector<32x128xf32>
    %9 = arith.select %7, %4, %8 : vector<32x128xi1>, vector<32x128xf32>
    %10 = vector.shape_cast %9 : vector<32x128xf32> to vector<4x8x128xf32>
    %cst_4 = arith.constant dense<0.000000e+00> : vector<8x128xf32>
    %11 = vector.multi_reduction <add>, %10, %cst_4 [0] : vector<4x8x128xf32> to vector<8x128xf32>
    %12 = arith.addf %0, %11 : vector<8x128xf32>
    %c0_5 = arith.constant 0 : index
    %c0_6 = arith.constant 0 : index
    %13 = vector.load %arg3[%c0_5, %c0_6] : memref<8x128xf32, #tpu.memory_space<vmem>>, vector<8x128xf32>
    tpu.vector_store %arg3[%c0_5, %c0_6], %12 {strides = array<i32>} : memref<8x128xf32, #tpu.memory_space<vmem>>, vector<8x128xf32>,
    return
  }
  func.func @transform_0(%arg0: i32) -> (i32, i32) {
    %c0_i32 = arith.constant 0 : i32
    %c0_i32_0 = arith.constant 0 : i32
    return %arg0, %c0_i32 : i32, i32
  }
  func.func @transform_1(%arg0: i32) -> (i32, i32) {
    %c0_i32 = arith.constant 0 : i32
    %c0_i32_0 = arith.constant 0 : i32
    return %arg0, %c0_i32 : i32, i32
  }
  func.func @transform_2(%arg0: i32) -> (i32, i32) {
    %c0_i32 = arith.constant 0 : i32
    %c0_i32_0 = arith.constant 0 : i32
    return %arg0, %c0_i32 : i32, i32
  }
}

</mosaic_0001>

<llo_original>
// kernel: tpu_custom_call.1
$region0: #{tpu_custom_call.1}
  #allocation0 [shape = 'u32[]', space=smem, size = 0x4, offset = 0x4, fixed_abs, tag = 'smem constant byte address 0x4 - core index']
  #allocation1 [shape = 'u32[72,128]{1,0:T(1,128)}', space=vmem, size = 0x9000, scoped, tag = 'internal scratch']
  %s0 = inlined_call_operand.hbm [shape: f32[2,128], index: 0, kind: input, shape index: {}]
  %s1 = inlined_call_operand.hbm [shape: f32[2,128], index: 1, kind: input, shape index: {}]
  %s2 = inlined_call_operand.hbm [shape: f32[8,128], index: 2, kind: output, shape index: {}]
  %s3 = sld [smem:[#allocation0]]
  $region26: #{tpu_custom_call.1} parent=0
    _
  %s5 = ssub.s32 1, %s3
  %s6 = scalar_select 0, %s5, %s3
  $region1: #{tpu_custom_call.1} parent=0
    #allocation2 [shape = 'u8[16384]{0}', space=vmem, size = 0x4000, scoped, tag = 'input window, operand 0, single buffered']
    #allocation3 [shape = 's32[1]{0}', space=sflag, size = 0x4, scoped, tag = 'scoped memory for tpu_custom_call.1']
    #allocation4 [shape = 's32[1]{0}', space=sflag, size = 0x4, scoped, tag = 'scoped memory for tpu_custom_call.1']
    #allocation5 [shape = 'u8[16384]{0}', space=vmem, size = 0x4000, scoped, tag = 'input window, operand 1, single buffered']
    #allocation6 [shape = 's32[1]{0}', space=sflag, size = 0x4, scoped, tag = 'scoped memory for tpu_custom_call.1']
    #allocation7 [shape = 'u8[4096]{0}', space=vmem, size = 0x1000, scoped, tag = 'output window, operand 0, single buffered']
    %7 = vsyncpa [#allocation3], 0
    %8 = vsyncpa [#allocation6], 0
    %9 = vsyncpa [#allocation4], 0
    // Predicated region
    $region2: #{tpu_custom_call.1} parent=1 // pred_check
      _
    $region3: #{tpu_custom_call.1} parent=1 // pred_check_branch
      %11 = sbr.rel (0) target = $region5
    $region4: #{tpu_custom_call.1} parent=1 // pred_region
      %13 = vsyncadd [#allocation3], 480
      %s14 = sshll.u32 %s0, 4
      %s15 = int_to_ptr.hbm [resolvable:$true] %s14
      %s16 = sshll.u32 [#allocation2], 4
      %s17 = int_to_ptr.vmem [resolvable:$true] %s16
      %22 = dma.hbm_to_vmem [thread:$0]  %s15, 32, %s17, [#allocation3], 32, 32, 2
    $region5: #{tpu_custom_call.1} parent=1 // pred_fallthru
      _
    // Predicated region
    $region6: #{tpu_custom_call.1} parent=1 // pred_check
      _
    $region7: #{tpu_custom_call.1} parent=1 // pred_check_branch
      %24 = sbr.rel (0) target = $region9
    $region8: #{tpu_custom_call.1} parent=1 // pred_region
      %26 = vsyncadd [#allocation6], 480
      %s27 = sshll.u32 %s1, 4
      %s28 = int_to_ptr.hbm [resolvable:$true] %s27
      %s29 = sshll.u32 [#allocation5], 4
      %s30 = int_to_ptr.vmem [resolvable:$true] %s29
      %35 = dma.hbm_to_vmem [thread:$0]  %s28, 32, %s30, [#allocation6], 32, 32, 2
    $region9: #{tpu_custom_call.1} parent=1 // pred_fallthru
      _
    // Predicated region
    $region10: #{tpu_custom_call.1} parent=1 // pred_check
      _
    $region11: #{tpu_custom_call.1} parent=1 // pred_check_branch
      %37 = sbr.rel (0) target = $region13
    $region12: #{tpu_custom_call.1} parent=1 // pred_region
      %39 = dma.done [#allocation3], 512
    $region13: #{tpu_custom_call.1} parent=1 // pred_fallthru
      _
    // Predicated region
    $region14: #{tpu_custom_call.1} parent=1 // pred_check
      _
    $region15: #{tpu_custom_call.1} parent=1 // pred_check_branch
      %41 = sbr.rel (0) target = $region17
    $region16: #{tpu_custom_call.1} parent=1 // pred_region
      %43 = dma.done [#allocation6], 512
    $region17: #{tpu_custom_call.1} parent=1 // pred_fallthru
      _
    %v44 = vld [vmem:[#allocation2] sm:$0xff]
    %v45 = vld [vmem:[#allocation2 + $0x8] sm:$0xff]
    %v46 = vld [vmem:[#allocation2 + $0x10] sm:$0xff]
    %v47 = vld [vmem:[#allocation2 + $0x18] sm:$0xff]
    %v48 = vld [vmem:[#allocation5] sm:$0xff]
    %v49 = vld [vmem:[#allocation5 + $0x8] sm:$0xff]
    %v50 = vld [vmem:[#allocation5 + $0x10] sm:$0xff]
    %v51 = vld [vmem:[#allocation5 + $0x18] sm:$0xff]
    %v52 = vsub.f32 %v44, %v48
    %v53 = vsub.f32 %v45, %v49
    %v54 = vsub.f32 %v46, %v50
    %v55 = vsub.f32 %v47, %v51
    %v56 = vmul.f32 %v52, %v52
    %v57 = vmul.f32 %v53, %v53
    %v58 = vmul.f32 %v54, %v54
    %v59 = vmul.f32 %v55, %v55
    %v60 = vlaneseq
    %v61 = vshrl.u32 %v60, 7
    %v62 = vadd.s32 %v61, 8
    %v63 = vadd.s32 %v61, 16
    %v64 = vadd.s32 %v61, 24
    %vm65 = vcmp.lt.s32.totalorder %v61, 2
    %vm66 = vcmp.lt.s32.totalorder %v62, 2
    %vm67 = vcmp.lt.s32.totalorder %v63, 2
    %vm68 = vcmp.lt.s32.totalorder %v64, 2
    %v69 = vsel %vm65, %v56, 0.0
    %v70 = vsel %vm66, %v57, 0.0
    %v71 = vsel %vm67, %v58, 0.0
    %v72 = vsel %vm68, %v59, 0.0
    %v73 = vadd.f32 %v69, %v70
    %v74 = vadd.f32 %v73, %v71
    %v75 = vadd.f32 %v74, %v72
    %v76 = vadd.f32 %v75, 0.0
    %77 = vst [vmem:[#allocation7] sm:$0xff] %v76
    // Predicated region
    $region18: #{tpu_custom_call.1} parent=1 // pred_check
      _
    $region19: #{tpu_custom_call.1} parent=1 // pred_check_branch
      %79 = sbr.rel (0) target = $region21
    $region20: #{tpu_custom_call.1} parent=1 // pred_region
      %81 = vsyncadd [#allocation4], 0
      %s83 = sshll.u32 [#allocation7], 4
      %s84 = int_to_ptr.vmem [resolvable:$true] %s83
      %s85 = sshll.u32 %s2, 4
      %s86 = int_to_ptr.hbm [resolvable:$true] %s85
      %88 = dma.vmem_to_hbm [thread:$0]  %s84, 128, %s86, [#allocation4]
    $region21: #{tpu_custom_call.1} parent=1 // pred_fallthru
      _
    // Predicated region
    $region22: #{tpu_custom_call.1} parent=1 // pred_check
      _
    $region23: #{tpu_custom_call.1} parent=1 // pred_check_branch
      %90 = sbr.rel (0) target = $region25
    $region24: #{tpu_custom_call.1} parent=1 // pred_region
      %92 = dma.done [#allocation4], 128
    $region25: #{tpu_custom_call.1} parent=1 // pred_fallthru
      _
    %93 = vsyncpa [#allocation3], 1
    %94 = vsyncpa [#allocation6], 1
    %95 = vsyncpa [#allocation4], 1

</llo_original>
